<compile_context>
chip_gen: v7x
topology: tpu7x:2x2x1
jax: 0.10.0
libtpu: 0.0.40
codegen_flags: <defaults>
</compile_context>

<pallas_src>
import jax
import jax.numpy as jnp
from jax.experimental import pallas as pl
from jax.experimental.pallas import tpu as pltpu

LANE = 128
IN = 784
EPS = 1e-5


def _round_up(x, m):
    return (x + m - 1) // m * m


def _lenet_kernel(x_ref,
                  w1_ref, c1_ref,
                  w2_ref, c2_ref,
                  w3_ref, b3_ref,
                  out_ref, a1_ref, a2_ref):
    """Fused 3-layer MLP forward for one batch tile.

    x_ref : (bt, 784)     f32 input rows (cast to bf16 in-kernel)
    wK    : (in_p, out_p) bf16 weights (BN scale folded in, zero-padded)
    cK/b3 : (1, out_p)    f32 folded bias (b*s + t), zero-padded
    out   : (bt, 128)     bf16 logits (first 10 columns valid)
    a1/a2 : (bt, n1_p)/(bt, n2_p) bf16 saved post-ReLU activations (padded)
    """
    # f32 -> bf16 cast inside the kernel (hides under the input DMA; avoids a
    # standalone XLA cast pass over the dominant HBM operand).
    x = x_ref[...].astype(w1_ref.dtype)

    # fc1 + folded bn1 + relu
    h1 = jnp.dot(x, w1_ref[...], preferred_element_type=jnp.float32)
    h1 = jnp.maximum(h1 + c1_ref[...], 0.0)
    h1b = h1.astype(a1_ref.dtype)
    a1_ref[...] = h1b

    # fc2 + folded bn2 + relu
    h2 = jnp.dot(h1b, w2_ref[...], preferred_element_type=jnp.float32)
    h2 = jnp.maximum(h2 + c2_ref[...], 0.0)
    h2b = h2.astype(a2_ref.dtype)
    a2_ref[...] = h2b

    # fc3 (logits, no activation)
    out = jnp.dot(h2b, w3_ref[...], preferred_element_type=jnp.float32) + b3_ref[...]
    out_ref[...] = out.astype(out_ref.dtype)


def prepare_lenet_params(params, *, compute_dtype=jnp.bfloat16, eps=EPS):
    """One-time prep: fold eval-mode BatchNorm1d into the Linear weights and a
    single per-feature bias (W' = W^T * s, c = b*s + t), zero-pad all feature
    dims to lane-dense multiples of 128, and cast weights to bf16.

    Compute this once and reuse across forward calls.
    """
    n1 = params["w1"].shape[0]     # PyTorch Linear weight layout: (out, in)
    n2 = params["w2"].shape[0]
    n_out = params["w3"].shape[0]
    n1p = _round_up(n1, LANE)
    n2p = _round_up(n2, LANE)
    nop = _round_up(n_out, LANE)

    s1 = params["bn1_gamma"] / jnp.sqrt(params["bn1_var"] + eps)
    t1 = params["bn1_beta"] - params["bn1_mean"] * s1
    s2 = params["bn2_gamma"] / jnp.sqrt(params["bn2_var"] + eps)
    t2 = params["bn2_beta"] - params["bn2_mean"] * s2

    def pad2(a, rows, cols, dtype):
        out = jnp.zeros((rows, cols), dtype)
        return out.at[: a.shape[0], : a.shape[1]].set(a.astype(dtype))

    return dict(
        n1=n1, n2=n2, n_out=n_out, n1p=n1p, n2p=n2p, nop=nop,
        w1=pad2(params["w1"].T * s1[None, :], IN, n1p, compute_dtype),
        c1=pad2((params["b1"] * s1 + t1).reshape(1, -1), 1, n1p, jnp.float32),
        w2=pad2(params["w2"].T * s2[None, :], n1p, n2p, compute_dtype),
        c2=pad2((params["b2"] * s2 + t2).reshape(1, -1), 1, n2p, jnp.float32),
        w3=pad2(params["w3"].T, n2p, nop, compute_dtype),
        c3=pad2(params["b3"].reshape(1, -1), 1, nop, jnp.float32),
    )


def lenet_forward(x_nchw, prep, *, batch_tile=1024, out_dtype=jnp.bfloat16,
                  unpad=True):
    """Runs the fused Lenet forward. x_nchw: (B, 1, 28, 28) float32.

    Returns (logits (B,10), act1 (B,n1), act2 (B,n2)) in bf16 by default, or
    the lane-padded slabs when unpad=False.
    """
    B = x_nchw.shape[0]
    n1p, n2p, nop = prep["n1p"], prep["n2p"], prep["nop"]

    # Contiguous reshape == x.view(-1, 784); keep f32 so x is read from HBM
    # exactly once (the bf16 cast happens inside the kernel).
    x = x_nchw.reshape(B, IN)

    # Batch tile: big enough to amortize the ~0.35 us per-grid-step overhead,
    # capped so the "parallel" batch axis has >= 2 steps when B allows it
    # (shards across both TensorCores on v7x).  Multiple of 16 for bf16
    # output sublane packing; never larger than the (8-aligned) batch.
    bt = int(min(batch_tile, max(16, _round_up(pl.cdiv(B, 2), 16))))
    bt = int(min(bt, _round_up(B, 8)))
    grid = (pl.cdiv(B, bt),)
    # No batch padding: rows are independent, so the partial last block's
    # out-of-bounds rows never contaminate valid rows and their writes are
    # dropped by Pallas.

    def rep(shape):
        # Block index is constant across the grid -> Pallas fetches the block
        # once and elides the refetch.  (Could be single-buffered via
        # pipeline_mode=pl.Buffered(1) to reclaim ~260 KiB VMEM; not needed —
        # per-tile VMEM is far below the scoped limit on all generations.)
        return pl.BlockSpec(shape, lambda i: (0, 0))

    out_shapes = (
        jax.ShapeDtypeStruct((B, nop), out_dtype),   # logits (lane-padded)
        jax.ShapeDtypeStruct((B, n1p), out_dtype),   # layer-1 activations
        jax.ShapeDtypeStruct((B, n2p), out_dtype),   # layer-2 activations
    )

    # Advisory cost hint so XLA schedules surrounding ops around the kernel.
    flops = 2 * B * (IN * n1p + n1p * n2p + n2p * nop)
    bytes_accessed = (
        B * IN * 4                                    # x, f32
        + 2 * (IN * n1p + n1p * n2p + n2p * nop)      # bf16 weights
        + 4 * (n1p + n2p + nop)                       # f32 folded biases
        + 2 * B * (nop + n1p + n2p)                   # bf16 outputs
    )

    fn = pl.pallas_call(
        _lenet_kernel,
        out_shape=out_shapes,
        grid_spec=pltpu.PrefetchScalarGridSpec(
            num_scalar_prefetch=0,
            grid=grid,
            in_specs=[
                pl.BlockSpec((bt, IN), lambda i: (i, 0)),   # x (batch-tiled)
                rep((IN, n1p)), rep((1, n1p)),
                rep((n1p, n2p)), rep((1, n2p)),
                rep((n2p, nop)), rep((1, nop)),
            ],
            out_specs=[
                pl.BlockSpec((bt, nop), lambda i: (i, 0)),
                pl.BlockSpec((bt, n1p), lambda i: (i, 0)),
                pl.BlockSpec((bt, n2p), lambda i: (i, 0)),
            ],
        ),
        compiler_params=pltpu.CompilerParams(
            dimension_semantics=("parallel",)),
        cost_estimate=pl.CostEstimate(
            flops=flops, transcendentals=0, bytes_accessed=bytes_accessed),
    )

    logits_p, a1_p, a2_p = fn(x, prep["w1"], prep["c1"], prep["w2"],
                              prep["c2"], prep["w3"], prep["c3"])

    if not unpad:
        return logits_p, a1_p, a2_p
    # Batch dim is already exact (no padding); only the small lane slices
    # remain.  Consumers that can work with the padded slabs should pass
    # unpad=False and slice lazily themselves.
    return (logits_p[:, : prep["n_out"]],
            a1_p[:, : prep["n1"]],
            a2_p[:, : prep["n2"]])


def init_params(key, n1, n2):
    """Deterministic parameter init (PyTorch-Linear-like uniform bounds)."""
    ks = jax.random.split(key, 8)

    def linear(kw, kb, fan_in, fan_out):
        bound = 1.0 / jnp.sqrt(fan_in)
        w = jax.random.uniform(kw, (fan_out, fan_in), jnp.float32, -bound, bound)
        b = jax.random.uniform(kb, (fan_out,), jnp.float32, -bound, bound)
        return w, b

    w1, b1 = linear(ks[0], ks[1], 784, n1)
    w2, b2 = linear(ks[2], ks[3], n1, n2)
    w3, b3 = linear(ks[4], ks[5], n2, 10)

    # Non-trivial BatchNorm params / running stats to exercise the folding.
    bn1_gamma = 1.0 + 0.1 * jax.random.normal(ks[6], (n1,), jnp.float32)
    bn1_beta = 0.05 * jnp.arange(n1, dtype=jnp.float32)
    bn1_mean = 0.01 * jnp.arange(n1, dtype=jnp.float32)
    bn1_var = jnp.abs(1.0 + 0.1 * jax.random.normal(ks[7], (n1,), jnp.float32))

    bn2_gamma = jnp.linspace(0.9, 1.1, n2, dtype=jnp.float32)
    bn2_beta = jnp.linspace(-0.1, 0.1, n2, dtype=jnp.float32)
    bn2_mean = jnp.linspace(-0.05, 0.05, n2, dtype=jnp.float32)
    bn2_var = jnp.linspace(0.8, 1.2, n2, dtype=jnp.float32)

    return dict(
        w1=w1, b1=b1, w2=w2, b2=b2, w3=w3, b3=b3,
        bn1_gamma=bn1_gamma, bn1_beta=bn1_beta, bn1_mean=bn1_mean, bn1_var=bn1_var,
        bn2_gamma=bn2_gamma, bn2_beta=bn2_beta, bn2_mean=bn2_mean, bn2_var=bn2_var,
    )


def lenet_reference(x_nchw, params):
    """Pure-JAX f32 reference of the PyTorch forward (eval mode)."""
    x = x_nchw.reshape(x_nchw.shape[0], 784).astype(jnp.float32)
    h = x @ params["w1"].T + params["b1"]
    h = (h - params["bn1_mean"]) / jnp.sqrt(params["bn1_var"] + EPS)
    h = jnp.maximum(h * params["bn1_gamma"] + params["bn1_beta"], 0.0)
    a1 = h
    h = h @ params["w2"].T + params["b2"]
    h = (h - params["bn2_mean"]) / jnp.sqrt(params["bn2_var"] + EPS)
    h = jnp.maximum(h * params["bn2_gamma"] + params["bn2_beta"], 0.0)
    a2 = h
    out = h @ params["w3"].T + params["b3"]
    return out, a1, a2


if __name__ == "__main__":
    key = jax.random.PRNGKey(0)
    k_x, k_p = jax.random.split(key)

    B, n1, n2 = 8, 64, 32
    x = jax.random.normal(k_x, (B, 1, 28, 28), jnp.float32)   # NCHW MNIST-like
    params = init_params(k_p, n1, n2)

    # One-time weight prep (BN folding, transpose, lane padding, bf16 cast) —
    # hoisted out of the per-forward path.
    prep = prepare_lenet_params(params)

    logits, act1, act2 = jax.block_until_ready(lenet_forward(x, prep))

    # Reproduce the SAVE_ACTIVS concatenation (eval mode, self.training == False)
    activations = {"l1": jnp.zeros((0, n1), jnp.float32),
                   "l2": jnp.zeros((0, n2), jnp.float32)}
    activations["l1"] = jnp.concatenate((activations["l1"],
                                         act1.astype(jnp.float32)))
    activations["l2"] = jnp.concatenate((activations["l2"],
                                         act2.astype(jnp.float32)))

    ref_logits, ref_a1, ref_a2 = lenet_reference(x, params)
    # bf16 weight/input streaming and bf16 outputs -> relaxed tolerance vs f32.
    assert jnp.allclose(logits.astype(jnp.float32), ref_logits,
                        atol=5e-2, rtol=5e-2)
    assert jnp.allclose(activations["l1"], ref_a1, atol=5e-2, rtol=5e-2)
    assert jnp.allclose(activations["l2"], ref_a2, atol=5e-2, rtol=5e-2)

    print("KERNEL_OK")
</pallas_src>

<mosaic_0001>
module attributes {stable_mosaic.version = 11 : i64} {
  func.func @_lenet_kernel(%arg0: i32, %arg1: memref<8x784xf32, #tpu.memory_space<vmem>>, %arg2: memref<784x128xbf16, #tpu.memory_space<vmem>>, %arg3: memref<1x128xf32, #tpu.memory_space<vmem>>, %arg4: memref<128x128xbf16, #tpu.memory_space<vmem>>, %arg5: memref<1x128xf32, #tpu.memory_space<vmem>>, %arg6: memref<128x128xbf16, #tpu.memory_space<vmem>>, %arg7: memref<1x128xf32, #tpu.memory_space<vmem>>, %arg8: memref<8x128xbf16, #tpu.memory_space<vmem>>, %arg9: memref<8x128xbf16, #tpu.memory_space<vmem>>, %arg10: memref<8x128xbf16, #tpu.memory_space<vmem>>) attributes {dimension_semantics = [#tpu.dimension_semantics<parallel>], iteration_bounds = array<i64: 1>, scalar_prefetch = 0 : i64, scratch_operands = 0 : i64, tpu.core_type = #tpu.core_type<tc>, window_params = [{transform_indices = @transform_0, window_bounds = array<i64: 8, 784>}, {pipeline_mode = #tpu.pipeline_mode<synchronous>, transform_indices = @transform_1, window_bounds = array<i64: 784, 128>}, {pipeline_mode = #tpu.pipeline_mode<synchronous>, transform_indices = @transform_2, window_bounds = array<i64: 1, 128>}, {pipeline_mode = #tpu.pipeline_mode<synchronous>, transform_indices = @transform_3, window_bounds = array<i64: 128, 128>}, {pipeline_mode = #tpu.pipeline_mode<synchronous>, transform_indices = @transform_4, window_bounds = array<i64: 1, 128>}, {pipeline_mode = #tpu.pipeline_mode<synchronous>, transform_indices = @transform_5, window_bounds = array<i64: 128, 128>}, {pipeline_mode = #tpu.pipeline_mode<synchronous>, transform_indices = @transform_6, window_bounds = array<i64: 1, 128>}, {transform_indices = @transform_7, window_bounds = array<i64: 8, 128>}, {transform_indices = @transform_8, window_bounds = array<i64: 8, 128>}, {transform_indices = @transform_9, window_bounds = array<i64: 8, 128>}]} {
    %c0 = arith.constant 0 : index
    %c0_0 = arith.constant 0 : index
    %0 = vector.load %arg1[%c0, %c0_0] : memref<8x784xf32, #tpu.memory_space<vmem>>, vector<8x784xf32>
    %1 = arith.truncf %0 : vector<8x784xf32> to vector<8x784xbf16>
    %c0_1 = arith.constant 0 : index
    %c0_2 = arith.constant 0 : index
    %2 = vector.load %arg2[%c0_1, %c0_2] : memref<784x128xbf16, #tpu.memory_space<vmem>>, vector<784x128xbf16>
    %cst = arith.constant dense<0.000000e+00> : vector<8x128xf32>
    %3 = tpu.matmul %1, %2, %cst {dimension_numbers = #tpu.dot_dimension_numbers<[1], [0], [0], [1], [0, 0, 1, 1], [], []>} : vector<8x784xbf16>, vector<784x128xbf16>, vector<8x128xf32> -> vector<8x128xf32>
    %c0_3 = arith.constant 0 : index
    %c0_4 = arith.constant 0 : index
    %4 = vector.load %arg3[%c0_3, %c0_4] : memref<1x128xf32, #tpu.memory_space<vmem>>, vector<1x128xf32>
    %5 = vector.broadcast %4 : vector<1x128xf32> to vector<8x128xf32>
    %6 = arith.addf %3, %5 : vector<8x128xf32>
    %cst_5 = arith.constant 0.000000e+00 : f32
    %7 = vector.broadcast %cst_5 : f32 to vector<8x128xf32>
    %8 = arith.maximumf %6, %7 : vector<8x128xf32>
    %9 = arith.truncf %8 : vector<8x128xf32> to vector<8x128xbf16>
    %c0_6 = arith.constant 0 : index
    %c0_7 = arith.constant 0 : index
    %10 = vector.load %arg9[%c0_6, %c0_7] : memref<8x128xbf16, #tpu.memory_space<vmem>>, vector<8x128xbf16>
    tpu.vector_store %arg9[%c0_6, %c0_7], %9 {strides = array<i32>} : memref<8x128xbf16, #tpu.memory_space<vmem>>, vector<8x128xbf16>,
    %c0_8 = arith.constant 0 : index
    %c0_9 = arith.constant 0 : index
    %11 = vector.load %arg4[%c0_8, %c0_9] : memref<128x128xbf16, #tpu.memory_space<vmem>>, vector<128x128xbf16>
    %cst_10 = arith.constant dense<0.000000e+00> : vector<8x128xf32>
    %12 = tpu.matmul %9, %11, %cst_10 {dimension_numbers = #tpu.dot_dimension_numbers<[1], [0], [0], [1], [0, 0, 1, 1], [], []>} : vector<8x128xbf16>, vector<128x128xbf16>, vector<8x128xf32> -> vector<8x128xf32>
    %c0_11 = arith.constant 0 : index
    %c0_12 = arith.constant 0 : index
    %13 = vector.load %arg5[%c0_11, %c0_12] : memref<1x128xf32, #tpu.memory_space<vmem>>, vector<1x128xf32>
    %14 = vector.broadcast %13 : vector<1x128xf32> to vector<8x128xf32>
    %15 = arith.addf %12, %14 : vector<8x128xf32>
    %cst_13 = arith.constant 0.000000e+00 : f32
    %16 = vector.broadcast %cst_13 : f32 to vector<8x128xf32>
    %17 = arith.maximumf %15, %16 : vector<8x128xf32>
    %18 = arith.truncf %17 : vector<8x128xf32> to vector<8x128xbf16>
    %c0_14 = arith.constant 0 : index
    %c0_15 = arith.constant 0 : index
    %19 = vector.load %arg10[%c0_14, %c0_15] : memref<8x128xbf16, #tpu.memory_space<vmem>>, vector<8x128xbf16>
    tpu.vector_store %arg10[%c0_14, %c0_15], %18 {strides = array<i32>} : memref<8x128xbf16, #tpu.memory_space<vmem>>, vector<8x128xbf16>,
    %c0_16 = arith.constant 0 : index
    %c0_17 = arith.constant 0 : index
    %20 = vector.load %arg6[%c0_16, %c0_17] : memref<128x128xbf16, #tpu.memory_space<vmem>>, vector<128x128xbf16>
    %cst_18 = arith.constant dense<0.000000e+00> : vector<8x128xf32>
    %21 = tpu.matmul %18, %20, %cst_18 {dimension_numbers = #tpu.dot_dimension_numbers<[1], [0], [0], [1], [0, 0, 1, 1], [], []>} : vector<8x128xbf16>, vector<128x128xbf16>, vector<8x128xf32> -> vector<8x128xf32>
    %c0_19 = arith.constant 0 : index
    %c0_20 = arith.constant 0 : index
    %22 = vector.load %arg7[%c0_19, %c0_20] : memref<1x128xf32, #tpu.memory_space<vmem>>, vector<1x128xf32>
    %23 = vector.broadcast %22 : vector<1x128xf32> to vector<8x128xf32>
    %24 = arith.addf %21, %23 : vector<8x128xf32>
    %25 = arith.truncf %24 : vector<8x128xf32> to vector<8x128xbf16>
    %c0_21 = arith.constant 0 : index
    %c0_22 = arith.constant 0 : index
    %26 = vector.load %arg8[%c0_21, %c0_22] : memref<8x128xbf16, #tpu.memory_space<vmem>>, vector<8x128xbf16>
    tpu.vector_store %arg8[%c0_21, %c0_22], %25 {strides = array<i32>} : memref<8x128xbf16, #tpu.memory_space<vmem>>, vector<8x128xbf16>,
    return
  }
  func.func @transform_0(%arg0: i32) -> (i32, i32) {
    %c0_i32 = arith.constant 0 : i32
    %c0_i32_0 = arith.constant 0 : i32
    return %arg0, %c0_i32 : i32, i32
  }
  func.func @transform_1(%arg0: i32) -> (i32, i32) {
    %c0_i32 = arith.constant 0 : i32
    %c0_i32_0 = arith.constant 0 : i32
    %c0_i32_1 = arith.constant 0 : i32
    return %c0_i32, %c0_i32_0 : i32, i32
  }
  func.func @transform_2(%arg0: i32) -> (i32, i32) {
    %c0_i32 = arith.constant 0 : i32
    %c0_i32_0 = arith.constant 0 : i32
    %c0_i32_1 = arith.constant 0 : i32
    return %c0_i32, %c0_i32_0 : i32, i32
  }
  func.func @transform_3(%arg0: i32) -> (i32, i32) {
    %c0_i32 = arith.constant 0 : i32
    %c0_i32_0 = arith.constant 0 : i32
    %c0_i32_1 = arith.constant 0 : i32
    return %c0_i32, %c0_i32_0 : i32, i32
  }
  func.func @transform_4(%arg0: i32) -> (i32, i32) {
    %c0_i32 = arith.constant 0 : i32
    %c0_i32_0 = arith.constant 0 : i32
    %c0_i32_1 = arith.constant 0 : i32
    return %c0_i32, %c0_i32_0 : i32, i32
  }
  func.func @transform_5(%arg0: i32) -> (i32, i32) {
    %c0_i32 = arith.constant 0 : i32
    %c0_i32_0 = arith.constant 0 : i32
    %c0_i32_1 = arith.constant 0 : i32
    return %c0_i32, %c0_i32_0 : i32, i32
  }
  func.func @transform_6(%arg0: i32) -> (i32, i32) {
    %c0_i32 = arith.constant 0 : i32
    %c0_i32_0 = arith.constant 0 : i32
    %c0_i32_1 = arith.constant 0 : i32
    return %c0_i32, %c0_i32_0 : i32, i32
  }
  func.func @transform_7(%arg0: i32) -> (i32, i32) {
    %c0_i32 = arith.constant 0 : i32
    %c0_i32_0 = arith.constant 0 : i32
    return %arg0, %c0_i32 : i32, i32
  }
  func.func @transform_8(%arg0: i32) -> (i32, i32) {
    %c0_i32 = arith.constant 0 : i32
    %c0_i32_0 = arith.constant 0 : i32
    return %arg0, %c0_i32 : i32, i32
  }
  func.func @transform_9(%arg0: i32) -> (i32, i32) {
    %c0_i32 = arith.constant 0 : i32
    %c0_i32_0 = arith.constant 0 : i32
    return %arg0, %c0_i32 : i32, i32
  }
}

</mosaic_0001>

<llo_original>
// kernel: tpu_custom_call.1
$region0: #{tpu_custom_call.1}
  #allocation0 [shape = 'u32[]', space=smem, size = 0x4, offset = 0x4, fixed_abs, tag = 'smem constant byte address 0x4 - core index']
  #allocation1 [shape = 'u32[144,128]{1,0:T(1,128)}', space=vmem, size = 0x12000, scoped, tag = 'internal scratch']
  %s0 = inlined_call_operand.hbm [shape: f32[8,784], index: 0, kind: input, shape index: {}]
  %s1 = inlined_call_operand.hbm [shape: bf16[784,128], index: 1, kind: input, shape index: {}]
  %s2 = inlined_call_operand.vmem [shape: f32[1,128], index: 2, kind: input, shape index: {}]
  %s3 = inlined_call_operand.hbm [shape: bf16[128,128], index: 3, kind: input, shape index: {}]
  %s4 = inlined_call_operand.vmem [shape: f32[1,128], index: 4, kind: input, shape index: {}]
  %s5 = inlined_call_operand.hbm [shape: bf16[128,128], index: 5, kind: input, shape index: {}]
  %s6 = inlined_call_operand.vmem [shape: f32[1,128], index: 6, kind: input, shape index: {}]
  %s7 = inlined_call_operand.hbm [shape: bf16[8,128], index: 7, kind: output, shape index: {0}]
  %s8 = inlined_call_operand.hbm [shape: bf16[8,128], index: 8, kind: output, shape index: {1}]
  %s9 = inlined_call_operand.hbm [shape: bf16[8,128], index: 9, kind: output, shape index: {2}]
  %10 = xla_tuple %s7, %s8, %s9
  %s11 = sld [smem:[#allocation0]]
  $region70: #{tpu_custom_call.1} parent=0
    _
  %s13 = ssub.s32 1, %s11
  %s14 = scalar_select 0, %s13, %s11
  $region1: #{tpu_custom_call.1} parent=0
    #allocation2 [shape = 'u8[28672]{0}', space=vmem, size = 0x7000, scoped, tag = 'input window, operand 0, single buffered']
    #allocation3 [shape = 's32[1]{0}', space=sflag, size = 0x4, scoped, tag = 'scoped memory for tpu_custom_call.1']
    #allocation4 [shape = 's32[1]{0}', space=sflag, size = 0x4, scoped, tag = 'scoped memory for tpu_custom_call.1']
    #allocation5 [shape = 'u8[200704]{0}', space=vmem, size = 0x31000, scoped, tag = 'input window, operand 1, single buffered']
    #allocation6 [shape = 's32[1]{0}', space=sflag, size = 0x4, scoped, tag = 'scoped memory for tpu_custom_call.1']
    #allocation7 [shape = 'u8[32768]{0}', space=vmem, size = 0x8000, scoped, tag = 'input window, operand 3, single buffered']
    #allocation8 [shape = 'u8[32768]{0}', space=vmem, size = 0x8000, scoped, tag = 'input window, operand 5, single buffered']
    #allocation9 [shape = 's32[1]{0}', space=sflag, size = 0x4, scoped, tag = 'scoped memory for tpu_custom_call.1']
    #allocation10 [shape = 'u8[2048]{0}', space=vmem, size = 0x800, scoped, tag = 'output window, operand 0, single buffered']
    #allocation11 [shape = 'u8[2048]{0}', space=vmem, size = 0x800, scoped, tag = 'output window, operand 1, single buffered']
    #allocation12 [shape = 's32[1]{0}', space=sflag, size = 0x4, scoped, tag = 'scoped memory for tpu_custom_call.1']
    #allocation13 [shape = 'u8[2048]{0}', space=vmem, size = 0x800, scoped, tag = 'output window, operand 2, single buffered']
    %15 = vsyncpa [#allocation3], 0
    %16 = vsyncpa [#allocation6], 0
    %17 = vsyncpa [#allocation9], 0
    %18 = vsyncpa [#allocation4], 0
    %19 = vsyncpa [#allocation12], 0
    // Predicated region
    $region2: #{tpu_custom_call.1} parent=1 // pred_check
      _
    $region3: #{tpu_custom_call.1} parent=1 // pred_check_branch
      %21 = sbr.rel (0) target = $region5
    $region4: #{tpu_custom_call.1} parent=1 // pred_region
      %s23 = ssub.s32 896, 896
      %24 = vsyncadd [#allocation3], %s23
      %s26 = sshll.u32 [#allocation2], 4
      %s27 = int_to_ptr.vmem [resolvable:$true] %s26
      %29 = dma.hbm_to_vmem [thread:$0]  %s0, 896, %s27, [#allocation3]
    $region5: #{tpu_custom_call.1} parent=1 // pred_fallthru
      _
    // Predicated region
    $region6: #{tpu_custom_call.1} parent=1 // pred_check
      _
    $region7: #{tpu_custom_call.1} parent=1 // pred_check_branch
      %31 = sbr.rel (0) target = $region9
    $region8: #{tpu_custom_call.1} parent=1 // pred_region
      %s33 = ssub.s32 6272, 6272
      %34 = vsyncadd [#allocation6], %s33
      %s35 = sshll.u32 [#allocation5], 4
      %s36 = int_to_ptr.vmem [resolvable:$true] %s35
      %41 = dma.hbm_to_vmem [thread:$0]  %s1, 6272, %s36, [#allocation6], 64, 64, 4
    $region9: #{tpu_custom_call.1} parent=1 // pred_fallthru
      _
    // Predicated region
    $region10: #{tpu_custom_call.1} parent=1 // pred_check
      _
    $region11: #{tpu_custom_call.1} parent=1 // pred_check_branch
      %43 = sbr.rel (0) target = $region13
    $region12: #{tpu_custom_call.1} parent=1 // pred_region
      _
    $region13: #{tpu_custom_call.1} parent=1 // pred_fallthru
      _
    // Predicated region
    $region14: #{tpu_custom_call.1} parent=1 // pred_check
      _
    $region15: #{tpu_custom_call.1} parent=1 // pred_check_branch
      %45 = sbr.rel (0) target = $region17
    $region16: #{tpu_custom_call.1} parent=1 // pred_region
      %s47 = ssub.s32 1024, 1024
      %48 = vsyncadd [#allocation6], %s47
      %s49 = sshll.u32 [#allocation7], 4
      %s50 = int_to_ptr.vmem [resolvable:$true] %s49
      %55 = dma.hbm_to_vmem [thread:$0]  %s3, 1024, %s50, [#allocation6], 64, 64, 4
    $region17: #{tpu_custom_call.1} parent=1 // pred_fallthru
      _
    // Predicated region
    $region18: #{tpu_custom_call.1} parent=1 // pred_check
      _
    $region19: #{tpu_custom_call.1} parent=1 // pred_check_branch
      %57 = sbr.rel (0) target = $region21
    $region20: #{tpu_custom_call.1} parent=1 // pred_region
      _
    $region21: #{tpu_custom_call.1} parent=1 // pred_fallthru
      _
    // Predicated region
    $region22: #{tpu_custom_call.1} parent=1 // pred_check
      _
    $region23: #{tpu_custom_call.1} parent=1 // pred_check_branch
      %59 = sbr.rel (0) target = $region25
    $region24: #{tpu_custom_call.1} parent=1 // pred_region
      %s61 = ssub.s32 1024, 1024
      %62 = vsyncadd [#allocation9], %s61
      %s63 = sshll.u32 [#allocation8], 4
      %s64 = int_to_ptr.vmem [resolvable:$true] %s63
      %69 = dma.hbm_to_vmem [thread:$0]  %s5, 1024, %s64, [#allocation9], 64, 64, 4
    $region25: #{tpu_custom_call.1} parent=1 // pred_fallthru
      _
    // Predicated region
    $region26: #{tpu_custom_call.1} parent=1 // pred_check
      _
    $region27: #{tpu_custom_call.1} parent=1 // pred_check_branch
      %71 = sbr.rel (0) target = $region29
    $region28: #{tpu_custom_call.1} parent=1 // pred_region
      _
    $region29: #{tpu_custom_call.1} parent=1 // pred_fallthru
      _
    // Predicated region
    $region30: #{tpu_custom_call.1} parent=1 // pred_check
      _
    $region31: #{tpu_custom_call.1} parent=1 // pred_check_branch
      %73 = sbr.rel (0) target = $region33
    $region32: #{tpu_custom_call.1} parent=1 // pred_region
      %74 = dma.done [#allocation3], 896
    $region33: #{tpu_custom_call.1} parent=1 // pred_fallthru
      _
    // Predicated region
    $region34: #{tpu_custom_call.1} parent=1 // pred_check
      _
    $region35: #{tpu_custom_call.1} parent=1 // pred_check_branch
      %76 = sbr.rel (0) target = $region37
    $region36: #{tpu_custom_call.1} parent=1 // pred_region
      %77 = dma.done [#allocation6], 6272
    $region37: #{tpu_custom_call.1} parent=1 // pred_fallthru
      _
    // Predicated region
    $region38: #{tpu_custom_call.1} parent=1 // pred_check
      _
    $region39: #{tpu_custom_call.1} parent=1 // pred_check_branch
      %79 = sbr.rel (0) target = $region41
    $region40: #{tpu_custom_call.1} parent=1 // pred_region
      %80 = dma.done [#allocation6], 1024
    $region41: #{tpu_custom_call.1} parent=1 // pred_fallthru
      _
    // Predicated region
    $region42: #{tpu_custom_call.1} parent=1 // pred_check
      _
    $region43: #{tpu_custom_call.1} parent=1 // pred_check_branch
      %82 = sbr.rel (0) target = $region45
    $region44: #{tpu_custom_call.1} parent=1 // pred_region
      %83 = dma.done [#allocation9], 1024
    $region45: #{tpu_custom_call.1} parent=1 // pred_fallthru
      _
    %v85 = vld [vmem:[#allocation2] sm:$0xff]
    %v86 = vld [vmem:[#allocation2 + $0x8] sm:$0xff]
    %v87 = vld [vmem:[#allocation2 + $0x10] sm:$0xff]
    %v88 = vld [vmem:[#allocation2 + $0x18] sm:$0xff]
    %v89 = vld [vmem:[#allocation2 + $0x20] sm:$0xff]
    %v90 = vld [vmem:[#allocation2 + $0x28] sm:$0xff]
    %v91 = vld [vmem:[#allocation2 + $0x30] sm:$0xff]
    %v92 = vpack.c.bf16 %v85, %v85
    %v93 = vpack.c.bf16 %v86, %v86
    %v94 = vpack.c.bf16 %v87, %v87
    %v95 = vpack.c.bf16 %v88, %v88
    %v96 = vpack.c.bf16 %v89, %v89
    %v97 = vpack.c.bf16 %v90, %v90
    %v98 = vpack.c.bf16 %v91, %v91
    %v99 = vld [vmem:[#allocation5] sm:$0xf]
    %v100 = vld [vmem:[#allocation5 + $0x4] sm:$0xf]
    %v101 = vld [vmem:[#allocation5 + $0x8] sm:$0xf]
    %v102 = vld [vmem:[#allocation5 + $0xc] sm:$0xf]
    %v103 = vld [vmem:[#allocation5 + $0x10] sm:$0xf]
    %v104 = vld [vmem:[#allocation5 + $0x14] sm:$0xf]
    %v105 = vld [vmem:[#allocation5 + $0x18] sm:$0xf]
    %v106 = vld [vmem:[#allocation5 + $0x1c] sm:$0xf]
    %v107 = vld [vmem:[#allocation5 + $0x20] sm:$0xf]
    %v108 = vld [vmem:[#allocation5 + $0x24] sm:$0xf]
    %v109 = vld [vmem:[#allocation5 + $0x28] sm:$0xf]
    %v110 = vld [vmem:[#allocation5 + $0x2c] sm:$0xf]
    %v111 = vld [vmem:[#allocation5 + $0x30] sm:$0xf]
    %v112 = vld [vmem:[#allocation5 + $0x34] sm:$0xf]
    %v113 = vld [vmem:[#allocation5 + $0x38] sm:$0xf]
    %v114 = vld [vmem:[#allocation5 + $0x3c] sm:$0xf]
    %v115 = vld [vmem:[#allocation5 + $0x40] sm:$0xf]
    %v116 = vld [vmem:[#allocation5 + $0x44] sm:$0xf]
    %v117 = vld [vmem:[#allocation5 + $0x48] sm:$0xf]
    %v118 = vld [vmem:[#allocation5 + $0x4c] sm:$0xf]
    %v119 = vld [vmem:[#allocation5 + $0x50] sm:$0xf]
    %v120 = vld [vmem:[#allocation5 + $0x54] sm:$0xf]
    %v121 = vld [vmem:[#allocation5 + $0x58] sm:$0xf]
    %v122 = vld [vmem:[#allocation5 + $0x5c] sm:$0xf]
    %v123 = vld [vmem:[#allocation5 + $0x60] sm:$0xf]
    %v124 = vld [vmem:[#allocation5 + $0x64] sm:$0xf]
    %v125 = vld [vmem:[#allocation5 + $0x68] sm:$0xf]
    %v126 = vld [vmem:[#allocation5 + $0x6c] sm:$0xf]
    %v127 = vld [vmem:[#allocation5 + $0x70] sm:$0xf]
    %v128 = vld [vmem:[#allocation5 + $0x74] sm:$0xf]
    %v129 = vld [vmem:[#allocation5 + $0x78] sm:$0xf]
    %v130 = vld [vmem:[#allocation5 + $0x7c] sm:$0xf]
    %v131 = vld [vmem:[#allocation5 + $0x80] sm:$0xf]
    %v132 = vld [vmem:[#allocation5 + $0x84] sm:$0xf]
    %v133 = vld [vmem:[#allocation5 + $0x88] sm:$0xf]
    %v134 = vld [vmem:[#allocation5 + $0x8c] sm:$0xf]
    %v135 = vld [vmem:[#allocation5 + $0x90] sm:$0xf]
    %v136 = vld [vmem:[#allocation5 + $0x94] sm:$0xf]
    %v137 = vld [vmem:[#allocation5 + $0x98] sm:$0xf]
    %v138 = vld [vmem:[#allocation5 + $0x9c] sm:$0xf]
    %v139 = vld [vmem:[#allocation5 + $0xa0] sm:$0xf]
    %v140 = vld [vmem:[#allocation5 + $0xa4] sm:$0xf]
    %v141 = vld [vmem:[#allocation5 + $0xa8] sm:$0xf]
    %v142 = vld [vmem:[#allocation5 + $0xac] sm:$0xf]
    %v143 = vld [vmem:[#allocation5 + $0xb0] sm:$0xf]
    %v144 = vld [vmem:[#allocation5 + $0xb4] sm:$0xf]
    %v145 = vld [vmem:[#allocation5 + $0xb8] sm:$0xf]
    %v146 = vld [vmem:[#allocation5 + $0xbc] sm:$0xf]
    %v147 = vld [vmem:[#allocation5 + $0xc0] sm:$0xf]
    %v148 = vld [vmem:[#allocation5 + $0xc4] sm:$0xf]
    %v149 = vld [vmem:[#allocation5 + $0xc8] sm:$0xf]
    %v150 = vld [vmem:[#allocation5 + $0xcc] sm:$0xf]
    %v151 = vld [vmem:[#allocation5 + $0xd0] sm:$0xf]
    %v152 = vld [vmem:[#allocation5 + $0xd4] sm:$0xf]
    %v153 = vld [vmem:[#allocation5 + $0xd8] sm:$0xf]
    %v154 = vld [vmem:[#allocation5 + $0xdc] sm:$0xf]
    %v155 = vld [vmem:[#allocation5 + $0xe0] sm:$0xf]
    %v156 = vld [vmem:[#allocation5 + $0xe4] sm:$0xf]
    %v157 = vld [vmem:[#allocation5 + $0xe8] sm:$0xf]
    %v158 = vld [vmem:[#allocation5 + $0xec] sm:$0xf]
    %v159 = vld [vmem:[#allocation5 + $0xf0] sm:$0xf]
    %v160 = vld [vmem:[#allocation5 + $0xf4] sm:$0xf]
    %v161 = vld [vmem:[#allocation5 + $0xf8] sm:$0xf]
    %v162 = vld [vmem:[#allocation5 + $0xfc] sm:$0xf]
    %v163 = vld [vmem:[#allocation5 + $0x100] sm:$0xf]
    %v164 = vld [vmem:[#allocation5 + $0x104] sm:$0xf]
    %v165 = vld [vmem:[#allocation5 + $0x108] sm:$0xf]
    %v166 = vld [vmem:[#allocation5 + $0x10c] sm:$0xf]
    %v167 = vld [vmem:[#allocation5 + $0x110] sm:$0xf]
    %v168 = vld [vmem:[#allocation5 + $0x114] sm:$0xf]
    %v169 = vld [vmem:[#allocation5 + $0x118] sm:$0xf]
    %v170 = vld [vmem:[#allocation5 + $0x11c] sm:$0xf]
    %v171 = vld [vmem:[#allocation5 + $0x120] sm:$0xf]
    %v172 = vld [vmem:[#allocation5 + $0x124] sm:$0xf]
    %v173 = vld [vmem:[#allocation5 + $0x128] sm:$0xf]
    %v174 = vld [vmem:[#allocation5 + $0x12c] sm:$0xf]
    %v175 = vld [vmem:[#allocation5 + $0x130] sm:$0xf]
    %v176 = vld [vmem:[#allocation5 + $0x134] sm:$0xf]
    %v177 = vld [vmem:[#allocation5 + $0x138] sm:$0xf]
    %v178 = vld [vmem:[#allocation5 + $0x13c] sm:$0xf]
    %v179 = vld [vmem:[#allocation5 + $0x140] sm:$0xf]
    %v180 = vld [vmem:[#allocation5 + $0x144] sm:$0xf]
    %v181 = vld [vmem:[#allocation5 + $0x148] sm:$0xf]
    %v182 = vld [vmem:[#allocation5 + $0x14c] sm:$0xf]
    %v183 = vld [vmem:[#allocation5 + $0x150] sm:$0xf]
    %v184 = vld [vmem:[#allocation5 + $0x154] sm:$0xf]
    %v185 = vld [vmem:[#allocation5 + $0x158] sm:$0xf]
    %v186 = vld [vmem:[#allocation5 + $0x15c] sm:$0xf]
    %v187 = vld [vmem:[#allocation5 + $0x160] sm:$0xf]
    %v188 = vld [vmem:[#allocation5 + $0x164] sm:$0xf]
    %v189 = vld [vmem:[#allocation5 + $0x168] sm:$0xf]
    %v190 = vld [vmem:[#allocation5 + $0x16c] sm:$0xf]
    %v191 = vld [vmem:[#allocation5 + $0x170] sm:$0xf]
    %v192 = vld [vmem:[#allocation5 + $0x174] sm:$0xf]
    %v193 = vld [vmem:[#allocation5 + $0x178] sm:$0xf]
    %v194 = vld [vmem:[#allocation5 + $0x17c] sm:$0xf]
    %v195 = vld [vmem:[#allocation5 + $0x180] sm:$0xf]
    %v196 = vld [vmem:[#allocation5 + $0x184] sm:$0xf]
    %v197 = vld [vmem:[%s2] sm:$0x1]
    %v199 = vlaneseq
    %v200 = vshrl.u32 %v199, 7
    %v201 = vsub.s32 0, %v200
    %v202 = vrot.slane %v197, %v201
    %v302 = vunpack.c.l.b16 %v99
    %v303 = vunpack.c.l.b16 %v100
    %v304 = vunpack.c.l.b16 %v101
    %v305 = vunpack.c.l.b16 %v102
    %v306 = vunpack.c.l.b16 %v103
    %v307 = vunpack.c.l.b16 %v104
    %v308 = vunpack.c.l.b16 %v105
    %v309 = vunpack.c.l.b16 %v106
    %v310 = vunpack.c.l.b16 %v107
    %v311 = vunpack.c.l.b16 %v108
    %v312 = vunpack.c.l.b16 %v109
    %v313 = vunpack.c.l.b16 %v110
    %v314 = vunpack.c.l.b16 %v111
    %v315 = vunpack.c.l.b16 %v112
    %v316 = vunpack.c.l.b16 %v113
    %v317 = vunpack.c.l.b16 %v114
    %v318 = vunpack.c.l.b16 %v115
    %v319 = vunpack.c.l.b16 %v116
    %v320 = vunpack.c.l.b16 %v117
    %v321 = vunpack.c.l.b16 %v118
    %v322 = vunpack.c.l.b16 %v119
    %v323 = vunpack.c.l.b16 %v120
    %v324 = vunpack.c.l.b16 %v121
    %v325 = vunpack.c.l.b16 %v122
    %v326 = vunpack.c.l.b16 %v123
    %v327 = vunpack.c.l.b16 %v124
    %v328 = vunpack.c.l.b16 %v125
    %v329 = vunpack.c.l.b16 %v126
    %v330 = vunpack.c.l.b16 %v127
    %v331 = vunpack.c.l.b16 %v128
    %v332 = vunpack.c.l.b16 %v129
    %v333 = vunpack.c.l.b16 %v130
    %v334 = vunpack.c.l.b16 %v131
    %v335 = vunpack.c.l.b16 %v132
    %v336 = vunpack.c.l.b16 %v133
    %v337 = vunpack.c.l.b16 %v134
    %v338 = vunpack.c.l.b16 %v135
    %v339 = vunpack.c.l.b16 %v136
    %v340 = vunpack.c.l.b16 %v137
    %v341 = vunpack.c.l.b16 %v138
    %v342 = vunpack.c.l.b16 %v139
    %v343 = vunpack.c.l.b16 %v140
    %v344 = vunpack.c.l.b16 %v141
    %v345 = vunpack.c.l.b16 %v142
    %v346 = vunpack.c.l.b16 %v143
    %v347 = vunpack.c.l.b16 %v144
    %v348 = vunpack.c.l.b16 %v145
    %v349 = vunpack.c.l.b16 %v146
    %v350 = vunpack.c.l.b16 %v147
    %v351 = vunpack.c.l.b16 %v148
    %v352 = vunpack.c.l.b16 %v149
    %v353 = vunpack.c.l.b16 %v150
    %v354 = vunpack.c.l.b16 %v151
    %v355 = vunpack.c.l.b16 %v152
    %v356 = vunpack.c.l.b16 %v153
    %v357 = vunpack.c.l.b16 %v154
    %v358 = vunpack.c.l.b16 %v155
    %v359 = vunpack.c.l.b16 %v156
    %v360 = vunpack.c.l.b16 %v157
    %v361 = vunpack.c.l.b16 %v158
    %v362 = vunpack.c.l.b16 %v159
    %v363 = vunpack.c.l.b16 %v160
    %v364 = vunpack.c.l.b16 %v161
    %v365 = vunpack.c.l.b16 %v162
    %v366 = vunpack.c.l.b16 %v163
    %v367 = vunpack.c.l.b16 %v164
    %v368 = vunpack.c.l.b16 %v165
    %v369 = vunpack.c.l.b16 %v166
    %v370 = vunpack.c.l.b16 %v167
    %v371 = vunpack.c.l.b16 %v168
    %v372 = vunpack.c.l.b16 %v169
    %v373 = vunpack.c.l.b16 %v170
    %v374 = vunpack.c.l.b16 %v171
    %v375 = vunpack.c.l.b16 %v172
    %v376 = vunpack.c.l.b16 %v173
    %v377 = vunpack.c.l.b16 %v174
    %v378 = vunpack.c.l.b16 %v175
    %v379 = vunpack.c.l.b16 %v176
    %v380 = vunpack.c.l.b16 %v177
    %v381 = vunpack.c.l.b16 %v178
    %v382 = vunpack.c.l.b16 %v179
    %v383 = vunpack.c.l.b16 %v180
    %v384 = vunpack.c.l.b16 %v181
    %v385 = vunpack.c.l.b16 %v182
    %v386 = vunpack.c.l.b16 %v183
    %v387 = vunpack.c.l.b16 %v184
    %v388 = vunpack.c.l.b16 %v185
    %v389 = vunpack.c.l.b16 %v186
    %v390 = vunpack.c.l.b16 %v187
    %v391 = vunpack.c.l.b16 %v188
    %v392 = vunpack.c.l.b16 %v189
    %v393 = vunpack.c.l.b16 %v190
    %v394 = vunpack.c.l.b16 %v191
    %v395 = vunpack.c.l.b16 %v192
    %v396 = vunpack.c.l.b16 %v193
    %v397 = vunpack.c.l.b16 %v194
    %v398 = vunpack.c.l.b16 %v195
    %v399 = vunpack.c.l.b16 %v196
    %v400 = vpack.c.b16 %v303, %v302
    %v401 = vpack.c.b16 %v305, %v304
    %v402 = vpack.c.b16 %v307, %v306
    %v403 = vpack.c.b16 %v309, %v308
    %v404 = vpack.c.b16 %v311, %v310
    %v405 = vpack.c.b16 %v313, %v312
    %v406 = vpack.c.b16 %v315, %v314
    %v407 = vpack.c.b16 %v317, %v316
    %v408 = vpack.c.b16 %v319, %v318
    %v409 = vpack.c.b16 %v321, %v320
    %v410 = vpack.c.b16 %v323, %v322
    %v411 = vpack.c.b16 %v325, %v324
    %v412 = vpack.c.b16 %v327, %v326
    %v413 = vpack.c.b16 %v329, %v328
    %v414 = vpack.c.b16 %v331, %v330
    %v415 = vpack.c.b16 %v333, %v332
    %v416 = vpack.c.b16 %v335, %v334
    %v417 = vpack.c.b16 %v337, %v336
    %v418 = vpack.c.b16 %v339, %v338
    %v419 = vpack.c.b16 %v341, %v340
    %v420 = vpack.c.b16 %v343, %v342
    %v421 = vpack.c.b16 %v345, %v344
    %v422 = vpack.c.b16 %v347, %v346
    %v423 = vpack.c.b16 %v349, %v348
    %v424 = vpack.c.b16 %v351, %v350
    %v425 = vpack.c.b16 %v353, %v352
    %v426 = vpack.c.b16 %v355, %v354
    %v427 = vpack.c.b16 %v357, %v356
    %v428 = vpack.c.b16 %v359, %v358
    %v429 = vpack.c.b16 %v361, %v360
    %v430 = vpack.c.b16 %v363, %v362
    %v431 = vpack.c.b16 %v365, %v364
    %v432 = vpack.c.b16 %v367, %v366
    %v433 = vpack.c.b16 %v369, %v368
    %v434 = vpack.c.b16 %v371, %v370
    %v435 = vpack.c.b16 %v373, %v372
    %v436 = vpack.c.b16 %v375, %v374
    %v437 = vpack.c.b16 %v377, %v376
    %v438 = vpack.c.b16 %v379, %v378
    %v439 = vpack.c.b16 %v381, %v380
    %v440 = vpack.c.b16 %v383, %v382
    %v441 = vpack.c.b16 %v385, %v384
    %v442 = vpack.c.b16 %v387, %v386
    %v443 = vpack.c.b16 %v389, %v388
    %v444 = vpack.c.b16 %v391, %v390
    %v445 = vpack.c.b16 %v393, %v392
    %v446 = vpack.c.b16 %v395, %v394
    %v447 = vpack.c.b16 %v397, %v396
    %v448 = vpack.c.b16 %v399, %v398
    %vm498 = vcmask 130048
    %v500 = vsel %vm498, %v98, 0
    %502 = vmatprep.subr.bf16.mxu0 0
    %503 = vmatpush1.bf16.msra.mxu0 %v400
    %504 = vmatprep.subr.bf16.mxu0 0
    %505 = vmatpush1.bf16.msra.mxu0 %v401
    %506 = vmatprep.subr.bf16.mxu0 0
    %507 = vmatpush1.bf16.msra.mxu0 %v402
    %508 = vmatprep.subr.bf16.mxu0 0
    %509 = vmatpush1.bf16.msra.mxu0 %v403
    %510 = vmatprep.subr.bf16.mxu0 0
    %511 = vmatpush1.bf16.msra.mxu0 %v404
    %512 = vmatprep.subr.bf16.mxu0 0
    %513 = vmatpush1.bf16.msra.mxu0 %v405
    %514 = vmatprep.subr.bf16.mxu0 0
    %515 = vmatpush1.bf16.msra.mxu0 %v406
    %516 = vmatprep.subr.bf16.mxu0 0
    %517 = vmatpush1.bf16.msra.mxu0 %v407
    %518 = vmatprep.subr.bf16.mxu0 0
    %519 = vmatpush1.bf16.msra.mxu0 %v408
    %520 = vmatprep.subr.bf16.mxu0 0
    %521 = vmatpush1.bf16.msra.mxu0 %v409
    %522 = vmatprep.subr.bf16.mxu0 0
    %523 = vmatpush1.bf16.msra.mxu0 %v410
    %524 = vmatprep.subr.bf16.mxu0 0
    %525 = vmatpush1.bf16.msra.mxu0 %v411
    %526 = vmatprep.subr.bf16.mxu0 0
    %527 = vmatpush1.bf16.msra.mxu0 %v412
    %528 = vmatprep.subr.bf16.mxu0 0
    %529 = vmatpush1.bf16.msra.mxu0 %v413
    %530 = vmatprep.subr.bf16.mxu0 0
    %531 = vmatpush1.bf16.msra.mxu0 %v414
    %532 = vmatprep.subr.bf16.mxu0 0
    %533 = vmatpush1.bf16.msra.mxu0 %v415
    %534 = vmatprep.mubr.bf16.mxu0 %v93
    %535 = vmatmul.mubr.bf16.gmra.mrb[0].mxu0 %v92
    %v536 = vpop.f32.mrb[0].mxu0
    %v537 = vadd.f32 %v202, %v536
    %v538 = vpop.f32.mrb[0].mxu0
    %v539 = vpop.f32.mrb[0].mxu0
    %v540 = vpop.f32.mrb[0].mxu0
    %541 = vdwg.mxu0
    %542 = vmatprep.subr.bf16.mxu0 0
    %543 = vmatpush1.bf16.msra.mxu0 %v416
    %544 = vmatprep.subr.bf16.mxu0 0
    %545 = vmatpush1.bf16.msra.mxu0 %v417
    %546 = vmatprep.subr.bf16.mxu0 0
    %547 = vmatpush1.bf16.msra.mxu0 %v418
    %548 = vmatprep.subr.bf16.mxu0 0
    %549 = vmatpush1.bf16.msra.mxu0 %v419
    %550 = vmatprep.subr.bf16.mxu0 0
    %551 = vmatpush1.bf16.msra.mxu0 %v420
    %552 = vmatprep.subr.bf16.mxu0 0
    %553 = vmatpush1.bf16.msra.mxu0 %v421
    %554 = vmatprep.subr.bf16.mxu0 0
    %555 = vmatpush1.bf16.msra.mxu0 %v422
    %556 = vmatprep.subr.bf16.mxu0 0
    %557 = vmatpush1.bf16.msra.mxu0 %v423
    %558 = vmatprep.subr.bf16.mxu0 0
    %559 = vmatpush1.bf16.msra.mxu0 %v424
    %560 = vmatprep.subr.bf16.mxu0 0
    %561 = vmatpush1.bf16.msra.mxu0 %v425
    %562 = vmatprep.subr.bf16.mxu0 0
    %563 = vmatpush1.bf16.msra.mxu0 %v426
    %564 = vmatprep.subr.bf16.mxu0 0
    %565 = vmatpush1.bf16.msra.mxu0 %v427
    %566 = vmatprep.subr.bf16.mxu0 0
    %567 = vmatpush1.bf16.msra.mxu0 %v428
    %568 = vmatprep.subr.bf16.mxu0 0
    %569 = vmatpush1.bf16.msra.mxu0 %v429
    %570 = vmatprep.subr.bf16.mxu0 0
    %571 = vmatpush1.bf16.msra.mxu0 %v430
    %572 = vmatprep.subr.bf16.mxu0 0
    %573 = vmatpush1.bf16.msra.mxu0 %v431
    %574 = vmatprep.mubr.bf16.mxu0 %v95
    %575 = vmatmul.mubr.bf16.gmra.mrb[0].mxu0 %v94
    %v576 = vpop.f32.mrb[0].mxu0
    %v577 = vadd.f32 %v537, %v576
    %v578 = vpop.f32.mrb[0].mxu0
    %v579 = vpop.f32.mrb[0].mxu0
    %v580 = vpop.f32.mrb[0].mxu0
    %581 = vdwg.mxu0
    %582 = vmatprep.subr.bf16.mxu0 0
    %583 = vmatpush1.bf16.msra.mxu0 %v432
    %584 = vmatprep.subr.bf16.mxu0 0
    %585 = vmatpush1.bf16.msra.mxu0 %v433
    %586 = vmatprep.subr.bf16.mxu0 0
    %587 = vmatpush1.bf16.msra.mxu0 %v434
    %588 = vmatprep.subr.bf16.mxu0 0
    %589 = vmatpush1.bf16.msra.mxu0 %v435
    %590 = vmatprep.subr.bf16.mxu0 0
    %591 = vmatpush1.bf16.msra.mxu0 %v436
    %592 = vmatprep.subr.bf16.mxu0 0
    %593 = vmatpush1.bf16.msra.mxu0 %v437
    %594 = vmatprep.subr.bf16.mxu0 0
    %595 = vmatpush1.bf16.msra.mxu0 %v438
    %596 = vmatprep.subr.bf16.mxu0 0
    %597 = vmatpush1.bf16.msra.mxu0 %v439
    %598 = vmatprep.subr.bf16.mxu0 0
    %599 = vmatpush1.bf16.msra.mxu0 %v440
    %600 = vmatprep.subr.bf16.mxu0 0
    %601 = vmatpush1.bf16.msra.mxu0 %v441
    %602 = vmatprep.subr.bf16.mxu0 0
    %603 = vmatpush1.bf16.msra.mxu0 %v442
    %604 = vmatprep.subr.bf16.mxu0 0
    %605 = vmatpush1.bf16.msra.mxu0 %v443
    %606 = vmatprep.subr.bf16.mxu0 0
    %607 = vmatpush1.bf16.msra.mxu0 %v444
    %608 = vmatprep.subr.bf16.mxu0 0
    %609 = vmatpush1.bf16.msra.mxu0 %v445
    %610 = vmatprep.subr.bf16.mxu0 0
    %611 = vmatpush1.bf16.msra.mxu0 %v446
    %612 = vmatprep.subr.bf16.mxu0 0
    %613 = vmatpush1.bf16.msra.mxu0 %v447
    %614 = vmatprep.mubr.bf16.mxu0 %v97
    %615 = vmatmul.mubr.bf16.gmra.mrb[0].mxu0 %v96
    %v616 = vpop.f32.mrb[0].mxu0
    %v617 = vadd.f32 %v577, %v616
    %v618 = vpop.f32.mrb[0].mxu0
    %v619 = vpop.f32.mrb[0].mxu0
    %v620 = vpop.f32.mrb[0].mxu0
    %621 = vdwg.mxu0
    %622 = vmatprep.subr.bf16.mxu0 0
    %623 = vmatpush1.bf16.msra.mxu0 %v448
    %624 = vmatprep.subr.bf16.mxu0 0
    %625 = vmatpush1.bf16.msra.mxu0 0
    %626 = vmatprep.subr.bf16.mxu0 0
    %627 = vmatpush1.bf16.msra.mxu0 0
    %628 = vmatprep.subr.bf16.mxu0 0
    %629 = vmatpush1.bf16.msra.mxu0 0
    %630 = vmatprep.subr.bf16.mxu0 0
    %631 = vmatpush1.bf16.msra.mxu0 0
    %632 = vmatprep.subr.bf16.mxu0 0
    %633 = vmatpush1.bf16.msra.mxu0 0
    %634 = vmatprep.subr.bf16.mxu0 0
    %635 = vmatpush1.bf16.msra.mxu0 0
    %636 = vmatprep.subr.bf16.mxu0 0
    %637 = vmatpush1.bf16.msra.mxu0 0
    %638 = vmatprep.subr.bf16.mxu0 0
    %639 = vmatpush1.bf16.msra.mxu0 0
    %640 = vmatprep.subr.bf16.mxu0 0
    %641 = vmatpush1.bf16.msra.mxu0 0
    %642 = vmatprep.subr.bf16.mxu0 0
    %643 = vmatpush1.bf16.msra.mxu0 0
    %644 = vmatprep.subr.bf16.mxu0 0
    %645 = vmatpush1.bf16.msra.mxu0 0
    %646 = vmatprep.subr.bf16.mxu0 0
    %647 = vmatpush1.bf16.msra.mxu0 0
    %648 = vmatprep.subr.bf16.mxu0 0
    %649 = vmatpush1.bf16.msra.mxu0 0
    %650 = vmatprep.subr.bf16.mxu0 0
    %651 = vmatpush1.bf16.msra.mxu0 0
    %652 = vmatprep.subr.bf16.mxu0 0
    %653 = vmatpush1.bf16.msra.mxu0 0
    %654 = vmatprep.mubr.bf16.mxu0 0
    %655 = vmatmul.mubr.bf16.gmra.mrb[0].mxu0 %v500
    %v656 = vpop.f32.mrb[0].mxu0
    %v657 = vadd.f32 %v617, %v656
    %v658 = vpop.f32.mrb[0].mxu0
    %v659 = vpop.f32.mrb[0].mxu0
    %v660 = vpop.f32.mrb[0].mxu0
    %661 = vdwg.mxu0
    %v662 = vmax.f32 %v657, 0.0
    %v663 = vpack.c.bf16 %v662, %v662
    %664 = vst [vmem:[#allocation11] sm:$0xf] %v663
    %v665 = vld [vmem:[#allocation7] sm:$0xf]
    %v666 = vld [vmem:[#allocation7 + $0x4] sm:$0xf]
    %v667 = vld [vmem:[#allocation7 + $0x8] sm:$0xf]
    %v668 = vld [vmem:[#allocation7 + $0xc] sm:$0xf]
    %v669 = vld [vmem:[#allocation7 + $0x10] sm:$0xf]
    %v670 = vld [vmem:[#allocation7 + $0x14] sm:$0xf]
    %v671 = vld [vmem:[#allocation7 + $0x18] sm:$0xf]
    %v672 = vld [vmem:[#allocation7 + $0x1c] sm:$0xf]
    %v673 = vld [vmem:[#allocation7 + $0x20] sm:$0xf]
    %v674 = vld [vmem:[#allocation7 + $0x24] sm:$0xf]
    %v675 = vld [vmem:[#allocation7 + $0x28] sm:$0xf]
    %v676 = vld [vmem:[#allocation7 + $0x2c] sm:$0xf]
    %v677 = vld [vmem:[#allocation7 + $0x30] sm:$0xf]
    %v678 = vld [vmem:[#allocation7 + $0x34] sm:$0xf]
    %v679 = vld [vmem:[#allocation7 + $0x38] sm:$0xf]
    %v680 = vld [vmem:[#allocation7 + $0x3c] sm:$0xf]
    %v681 = vld [vmem:[%s4] sm:$0x1]
    %v683 = vlaneseq
    %v684 = vshrl.u32 %v683, 7
    %v685 = vsub.s32 0, %v684
    %v686 = vrot.slane %v681, %v685
    %v704 = vunpack.c.l.b16 %v665
    %v705 = vunpack.c.l.b16 %v666
    %v706 = vunpack.c.l.b16 %v667
    %v707 = vunpack.c.l.b16 %v668
    %v708 = vunpack.c.l.b16 %v669
    %v709 = vunpack.c.l.b16 %v670
    %v710 = vunpack.c.l.b16 %v671
    %v711 = vunpack.c.l.b16 %v672
    %v712 = vunpack.c.l.b16 %v673
    %v713 = vunpack.c.l.b16 %v674
    %v714 = vunpack.c.l.b16 %v675
    %v715 = vunpack.c.l.b16 %v676
    %v716 = vunpack.c.l.b16 %v677
    %v717 = vunpack.c.l.b16 %v678
    %v718 = vunpack.c.l.b16 %v679
    %v719 = vunpack.c.l.b16 %v680
    %v720 = vpack.c.b16 %v705, %v704
    %v721 = vpack.c.b16 %v707, %v706
    %v722 = vpack.c.b16 %v709, %v708
    %v723 = vpack.c.b16 %v711, %v710
    %v724 = vpack.c.b16 %v713, %v712
    %v725 = vpack.c.b16 %v715, %v714
    %v726 = vpack.c.b16 %v717, %v716
    %v727 = vpack.c.b16 %v719, %v718
    %736 = vmatprep.subr.bf16.mxu0 0
    %737 = vmatpush1.bf16.msra.mxu0 %v720
    %738 = vmatprep.subr.bf16.mxu0 0
    %739 = vmatpush1.bf16.msra.mxu0 %v721
    %740 = vmatprep.subr.bf16.mxu0 0
    %741 = vmatpush1.bf16.msra.mxu0 %v722
    %742 = vmatprep.subr.bf16.mxu0 0
    %743 = vmatpush1.bf16.msra.mxu0 %v723
    %744 = vmatprep.subr.bf16.mxu0 0
    %745 = vmatpush1.bf16.msra.mxu0 %v724
    %746 = vmatprep.subr.bf16.mxu0 0
    %747 = vmatpush1.bf16.msra.mxu0 %v725
    %748 = vmatprep.subr.bf16.mxu0 0
    %749 = vmatpush1.bf16.msra.mxu0 %v726
    %750 = vmatprep.subr.bf16.mxu0 0
    %751 = vmatpush1.bf16.msra.mxu0 %v727
    %752 = vmatprep.subr.bf16.mxu0 0
    %753 = vmatpush1.bf16.msra.mxu0 0
    %754 = vmatprep.subr.bf16.mxu0 0
    %755 = vmatpush1.bf16.msra.mxu0 0
    %756 = vmatprep.subr.bf16.mxu0 0
    %757 = vmatpush1.bf16.msra.mxu0 0
    %758 = vmatprep.subr.bf16.mxu0 0
    %759 = vmatpush1.bf16.msra.mxu0 0
    %760 = vmatprep.subr.bf16.mxu0 0
    %761 = vmatpush1.bf16.msra.mxu0 0
    %762 = vmatprep.subr.bf16.mxu0 0
    %763 = vmatpush1.bf16.msra.mxu0 0
    %764 = vmatprep.subr.bf16.mxu0 0
    %765 = vmatpush1.bf16.msra.mxu0 0
    %766 = vmatprep.subr.bf16.mxu0 0
    %767 = vmatpush1.bf16.msra.mxu0 0
    %768 = vmatprep.mubr.bf16.mxu0 0
    %769 = vmatmul.mubr.bf16.gmra.mrb[0].mxu0 %v663
    %v770 = vpop.f32.mrb[0].mxu0
    %v771 = vadd.f32 %v686, %v770
    %v772 = vpop.f32.mrb[0].mxu0
    %v773 = vpop.f32.mrb[0].mxu0
    %v774 = vpop.f32.mrb[0].mxu0
    %775 = vdwg.mxu0
    %v776 = vmax.f32 %v771, 0.0
    %v777 = vpack.c.bf16 %v776, %v776
    %778 = vst [vmem:[#allocation13] sm:$0xf] %v777
    %v779 = vld [vmem:[#allocation8] sm:$0xf]
    %v780 = vld [vmem:[#allocation8 + $0x4] sm:$0xf]
    %v781 = vld [vmem:[#allocation8 + $0x8] sm:$0xf]
    %v782 = vld [vmem:[#allocation8 + $0xc] sm:$0xf]
    %v783 = vld [vmem:[#allocation8 + $0x10] sm:$0xf]
    %v784 = vld [vmem:[#allocation8 + $0x14] sm:$0xf]
    %v785 = vld [vmem:[#allocation8 + $0x18] sm:$0xf]
    %v786 = vld [vmem:[#allocation8 + $0x1c] sm:$0xf]
    %v787 = vld [vmem:[#allocation8 + $0x20] sm:$0xf]
    %v788 = vld [vmem:[#allocation8 + $0x24] sm:$0xf]
    %v789 = vld [vmem:[#allocation8 + $0x28] sm:$0xf]
    %v790 = vld [vmem:[#allocation8 + $0x2c] sm:$0xf]
    %v791 = vld [vmem:[#allocation8 + $0x30] sm:$0xf]
    %v792 = vld [vmem:[#allocation8 + $0x34] sm:$0xf]
    %v793 = vld [vmem:[#allocation8 + $0x38] sm:$0xf]
    %v794 = vld [vmem:[#allocation8 + $0x3c] sm:$0xf]
    %v795 = vld [vmem:[%s6] sm:$0x1]
    %v797 = vlaneseq
    %v798 = vshrl.u32 %v797, 7
    %v799 = vsub.s32 0, %v798
    %v800 = vrot.slane %v795, %v799
    %v818 = vunpack.c.l.b16 %v779
    %v819 = vunpack.c.l.b16 %v780
    %v820 = vunpack.c.l.b16 %v781
    %v821 = vunpack.c.l.b16 %v782
    %v822 = vunpack.c.l.b16 %v783
    %v823 = vunpack.c.l.b16 %v784
    %v824 = vunpack.c.l.b16 %v785
    %v825 = vunpack.c.l.b16 %v786
    %v826 = vunpack.c.l.b16 %v787
    %v827 = vunpack.c.l.b16 %v788
    %v828 = vunpack.c.l.b16 %v789
    %v829 = vunpack.c.l.b16 %v790
    %v830 = vunpack.c.l.b16 %v791
    %v831 = vunpack.c.l.b16 %v792
    %v832 = vunpack.c.l.b16 %v793
    %v833 = vunpack.c.l.b16 %v794
    %v834 = vpack.c.b16 %v819, %v818
    %v835 = vpack.c.b16 %v821, %v820
    %v836 = vpack.c.b16 %v823, %v822
    %v837 = vpack.c.b16 %v825, %v824
    %v838 = vpack.c.b16 %v827, %v826
    %v839 = vpack.c.b16 %v829, %v828
    %v840 = vpack.c.b16 %v831, %v830
    %v841 = vpack.c.b16 %v833, %v832
    %850 = vmatprep.subr.bf16.mxu0 0
    %851 = vmatpush1.bf16.msra.mxu0 %v834
    %852 = vmatprep.subr.bf16.mxu0 0
    %853 = vmatpush1.bf16.msra.mxu0 %v835
    %854 = vmatprep.subr.bf16.mxu0 0
    %855 = vmatpush1.bf16.msra.mxu0 %v836
    %856 = vmatprep.subr.bf16.mxu0 0
    %857 = vmatpush1.bf16.msra.mxu0 %v837
    %858 = vmatprep.subr.bf16.mxu0 0
    %859 = vmatpush1.bf16.msra.mxu0 %v838
    %860 = vmatprep.subr.bf16.mxu0 0
    %861 = vmatpush1.bf16.msra.mxu0 %v839
    %862 = vmatprep.subr.bf16.mxu0 0
    %863 = vmatpush1.bf16.msra.mxu0 %v840
    %864 = vmatprep.subr.bf16.mxu0 0
    %865 = vmatpush1.bf16.msra.mxu0 %v841
    %866 = vmatprep.subr.bf16.mxu0 0
    %867 = vmatpush1.bf16.msra.mxu0 0
    %868 = vmatprep.subr.bf16.mxu0 0
    %869 = vmatpush1.bf16.msra.mxu0 0
    %870 = vmatprep.subr.bf16.mxu0 0
    %871 = vmatpush1.bf16.msra.mxu0 0
    %872 = vmatprep.subr.bf16.mxu0 0
    %873 = vmatpush1.bf16.msra.mxu0 0
    %874 = vmatprep.subr.bf16.mxu0 0
    %875 = vmatpush1.bf16.msra.mxu0 0
    %876 = vmatprep.subr.bf16.mxu0 0
    %877 = vmatpush1.bf16.msra.mxu0 0
    %878 = vmatprep.subr.bf16.mxu0 0
    %879 = vmatpush1.bf16.msra.mxu0 0
    %880 = vmatprep.subr.bf16.mxu0 0
    %881 = vmatpush1.bf16.msra.mxu0 0
    %882 = vmatprep.mubr.bf16.mxu0 0
    %883 = vmatmul.mubr.bf16.gmra.mrb[0].mxu0 %v777
    %v884 = vpop.f32.mrb[0].mxu0
    %v885 = vadd.f32 %v800, %v884
    %v886 = vpop.f32.mrb[0].mxu0
    %v887 = vpop.f32.mrb[0].mxu0
    %v888 = vpop.f32.mrb[0].mxu0
    %889 = vdwg.mxu0
    %v890 = vpack.c.bf16 %v885, %v885
    %891 = vst [vmem:[#allocation10] sm:$0xf] %v890
    // Predicated region
    $region46: #{tpu_custom_call.1} parent=1 // pred_check
      _
    $region47: #{tpu_custom_call.1} parent=1 // pred_check_branch
      %893 = sbr.rel (0) target = $region49
    $region48: #{tpu_custom_call.1} parent=1 // pred_region
      %s895 = ssub.s32 64, 64
      %896 = vsyncadd [#allocation4], %s895
      %s898 = sshll.u32 [#allocation10], 4
      %s899 = int_to_ptr.vmem [resolvable:$true] %s898
      %901 = dma.vmem_to_hbm [thread:$0]  %s899, 64, %s7, [#allocation4]
    $region49: #{tpu_custom_call.1} parent=1 // pred_fallthru
      _
    // Predicated region
    $region50: #{tpu_custom_call.1} parent=1 // pred_check
      _
    $region51: #{tpu_custom_call.1} parent=1 // pred_check_branch
      %903 = sbr.rel (0) target = $region53
    $region52: #{tpu_custom_call.1} parent=1 // pred_region
      %s905 = ssub.s32 64, 64
      %906 = vsyncadd [#allocation12], %s905
      %s908 = sshll.u32 [#allocation11], 4
      %s909 = int_to_ptr.vmem [resolvable:$true] %s908
      %911 = dma.vmem_to_hbm [thread:$0]  %s909, 64, %s8, [#allocation12]
    $region53: #{tpu_custom_call.1} parent=1 // pred_fallthru
      _
    // Predicated region
    $region54: #{tpu_custom_call.1} parent=1 // pred_check
      _
    $region55: #{tpu_custom_call.1} parent=1 // pred_check_branch
      %913 = sbr.rel (0) target = $region57
    $region56: #{tpu_custom_call.1} parent=1 // pred_region
      %s915 = ssub.s32 64, 64
      %916 = vsyncadd [#allocation12], %s915
      %s918 = sshll.u32 [#allocation13], 4
      %s919 = int_to_ptr.vmem [resolvable:$true] %s918
      %921 = dma.vmem_to_hbm [thread:$0]  %s919, 64, %s9, [#allocation12]
    $region57: #{tpu_custom_call.1} parent=1 // pred_fallthru
      _
    // Predicated region
    $region58: #{tpu_custom_call.1} parent=1 // pred_check
      _
    $region59: #{tpu_custom_call.1} parent=1 // pred_check_branch
      %923 = sbr.rel (0) target = $region61
    $region60: #{tpu_custom_call.1} parent=1 // pred_region
      %924 = dma.done [#allocation4], 64
    $region61: #{tpu_custom_call.1} parent=1 // pred_fallthru
      _
    // Predicated region
    $region62: #{tpu_custom_call.1} parent=1 // pred_check
      _
    $region63: #{tpu_custom_call.1} parent=1 // pred_check_branch
      %926 = sbr.rel (0) target = $region65
    $region64: #{tpu_custom_call.1} parent=1 // pred_region
      %927 = dma.done [#allocation12], 64
    $region65: #{tpu_custom_call.1} parent=1 // pred_fallthru
      _
    // Predicated region
    $region66: #{tpu_custom_call.1} parent=1 // pred_check
      _
    $region67: #{tpu_custom_call.1} parent=1 // pred_check_branch
      %929 = sbr.rel (0) target = $region69
    $region68: #{tpu_custom_call.1} parent=1 // pred_region
      %930 = dma.done [#allocation12], 64
    $region69: #{tpu_custom_call.1} parent=1 // pred_fallthru
      _
    %931 = vsyncpa [#allocation3], 1
    %932 = vsyncpa [#allocation6], 1
    %933 = vsyncpa [#allocation9], 1
    %934 = vsyncpa [#allocation4], 1
    %935 = vsyncpa [#allocation12], 1

</llo_original>
